<compile_context>
chip_gen: v7x
topology: tpu7x:2x2x1
jax: 0.10.0
libtpu: 0.0.40
codegen_flags: <defaults>
</compile_context>

<pallas_src>
import functools

import jax
import jax.numpy as jnp
import numpy as np
from jax.experimental import pallas as pl
from jax.experimental.pallas import tpu as pltpu


# ---------------- parameter setup (plain JAX glue, mirrors the PyTorch __init__) --------

def initialize_coeffs(init, grid_tensor):
    """c[k] = f[k] at each knot (B1 splines are interpolators)."""
    if init == 'identity':
        return grid_tensor
    elif init == 'relu':
        return jnp.maximum(grid_tensor, 0.0)
    elif init == 'zero':
        return jnp.zeros_like(grid_tensor)
    elif init == 'soft_threshold':
        lam = 0.003
        return jnp.where(grid_tensor > lam, grid_tensor - lam,
                         jnp.where(grid_tensor < -lam, grid_tensor + lam, 0.0))
    raise ValueError('init should be in [identity, relu, zero, soft_threshold].')


def slope_clipping(cs, T):
    """1-Lipschitz projection of the spline coefficients (param prep, not hot path)."""
    new_slopes = jnp.clip(cs[:, 1:] - cs[:, :-1], 0.0, T)
    new_cs = jnp.concatenate(
        [jnp.zeros((cs.shape[0], 1), cs.dtype), jnp.cumsum(new_slopes, axis=1)], axis=1)
    new_cs = new_cs - new_cs[:, cs.shape[1] // 2][:, None]
    return new_cs


# ---------------- Pallas kernel (elementwise spline evaluation: the hot path) -----------

def _spline_kernel(g_ref, b0_ref, b1_ref, a_ref, x_ref, o_ref, *, nk, knots):
    c = pl.program_id(0)                              # channel index from the grid

    g = g_ref[c]                                      # per-channel scalars from SMEM
    b0 = b0_ref[c]
    b1 = b1_ref[c]

    v = x_ref[...] * g                                # (N, 1, TR, 128) lane-dense block
    acc_a = b0 + b1 * v

    if nk == 0:                                       # degenerate 2-coefficient spline
        o_ref[...] = acc_a.astype(o_ref.dtype)
        return

    base = c * nk
    # Two accumulators -> half the serial-add depth; knots[k] are static immediates.
    acc_b = a_ref[base] * jnp.maximum(v, knots[0])
    for k in range(1, nk):
        term = a_ref[base + k] * jnp.maximum(v, knots[k])
        if k % 2 == 1:
            acc_a = acc_a + term
        else:
            acc_b = acc_b + term
    o_ref[...] = (acc_a + acc_b).astype(o_ref.dtype)


def linear_spline_forward(x_nchw, coefficients_vect, scaling_coeffs_vect, *, size, range_):
    """Forward pass of LinearSpline (mode='conv', NCHW input)."""
    N, C, H, W = x_nchw.shape
    size = int(size)
    grid_val = 2.0 * float(range_) / (size - 1)
    even = (size % 2 == 0)
    half = size // 2
    nk = size - 2                                     # number of interior (ReLU) knots
    f32 = jnp.float32

    # 1-Lipschitz projected coefficients, interval slopes, second differences.
    lip = slope_clipping(coefficients_vect.reshape(C, size).astype(f32), grid_val)
    s = lip[:, 1:] - lip[:, :-1]                      # (C, size-1) interval slopes
    a = s[:, 1:] - s[:, :-1] if nk > 0 else jnp.zeros((C, 0), f32)   # (C, nk)

    scale = scaling_coeffs_vect.reshape(C).astype(f32)
    inv_scale = 1.0 / scale

    # Fold scale, 1/grid, the even half-grid shifts and all knot offsets into
    # per-channel constants:  out = b0 + b1*v + sum_k A_k * max(v, t_k),  v = x*g.
    h_sh = 0.5 if even else 0.0                       # input shift in grid units
    ev = (grid_val * 0.5) if even else 0.0            # output shift
    u0 = float(-half)                                 # first knot position (grid units)
    knots_np = np.arange(1, size - 1, dtype=np.float64) - half + h_sh   # (nk,)
    knots = tuple(float(t) for t in knots_np)         # static compile-time constants

    g = scale * (1.0 / grid_val)                      # (C,)
    b1 = s[:, 0] * inv_scale                          # (C,)
    if nk > 0:
        knot_dot = (a * jnp.asarray(knots_np, f32)[None, :]).sum(axis=1)
        a_flat = (a * inv_scale[:, None]).reshape(-1)            # (C*nk,)
    else:
        knot_dot = jnp.zeros((C,), f32)
        a_flat = jnp.zeros((C,), f32)                 # dummy (never read)
    b0 = (lip[:, 0] - s[:, 0] * (h_sh + u0) - knot_dot + ev) * inv_scale   # (C,)

    # Zero-copy reshape to a lane-dense layout: (N, C, R, 128) with R = HW/128 rows.
    LANES = 128
    HW = H * W
    R = (HW + LANES - 1) // LANES
    HW_pad = R * LANES
    x_flat = x_nchw.reshape(N, C, HW)
    if HW_pad != HW:
        # TODO(synk): spatial pad copies data; only hit when H*W is not a multiple of 128.
        x_flat = jnp.pad(x_flat, ((0, 0), (0, 0), (0, HW_pad - HW)))
    x4 = x_flat.reshape(N, C, R, LANES)

    # Spatial tiling: one (N, 1, TR, 128) slab per grid step; cap at ~2 MiB/buffer.
    MAX_ROWS = 4096                                   # N*TR rows -> 2 MiB f32 per buffer
    if R % 8 != 0 or N * R <= MAX_ROWS:
        TR = R                                        # full extent satisfies (8,128) rule
    else:
        cap = max(8, min(R, MAX_ROWS // max(N, 1)) // 8 * 8)
        TR = R
        for t in range(cap, 7, -8):                   # largest mult-of-8 divisor of R
            if R % t == 0:
                TR = t
                break
    n_sp = R // TR if R % TR == 0 else pl.cdiv(R, TR)

    out4 = pl.pallas_call(
        functools.partial(_spline_kernel, nk=nk, knots=knots),
        out_shape=jax.ShapeDtypeStruct((N, C, R, LANES), x_nchw.dtype),
        grid_spec=pltpu.PrefetchScalarGridSpec(
            num_scalar_prefetch=0,
            grid=(C, n_sp),
            in_specs=[
                pl.BlockSpec(memory_space=pltpu.MemorySpace.SMEM),   # g   (C,)
                pl.BlockSpec(memory_space=pltpu.MemorySpace.SMEM),   # b0  (C,)
                pl.BlockSpec(memory_space=pltpu.MemorySpace.SMEM),   # b1  (C,)
                pl.BlockSpec(memory_space=pltpu.MemorySpace.SMEM),   # A   (C*nk,)
                pl.BlockSpec((N, 1, TR, LANES), lambda c, sp: (0, c, sp, 0)),
            ],
            out_specs=pl.BlockSpec((N, 1, TR, LANES), lambda c, sp: (0, c, sp, 0)),
        ),
        compiler_params=pltpu.CompilerParams(
            dimension_semantics=("parallel", "parallel")),
    )(g, b0, b1, a_flat, x4)

    out_flat = out4.reshape(N, C, HW_pad)
    if HW_pad != HW:
        out_flat = out_flat[:, :, :HW]
    return out_flat.reshape(N, C, H, W)


# ---------------- pure-JAX reference (direct transcription of LinearSpline_Func) --------

def reference_forward(x, coefficients_vect, scaling_coeffs_vect, *, size, range_):
    N, C, H, W = x.shape
    grid = 2.0 * float(range_) / (size - 1)
    even = (size % 2 == 0)
    coeffs = slope_clipping(coefficients_vect.reshape(C, size), grid).reshape(-1)
    zero_knot = jnp.arange(C) * size + size // 2

    xs = x * scaling_coeffs_vect
    max_range = grid * (size // 2 - 1)
    if even:
        xs = xs - grid / 2
        max_range = grid * (size // 2 - 2)
    x_cl = jnp.clip(xs, -grid * (size // 2), max_range)
    floored = jnp.floor(x_cl / grid)
    fracs = xs / grid - floored
    idx = (zero_knot.reshape(1, -1, 1, 1) + floored).astype(jnp.int32)
    out = coeffs[idx + 1] * fracs + coeffs[idx] * (1.0 - fracs)
    if even:
        out = out + grid / 2
    return out / scaling_coeffs_vect


# ---------------- main ----------------

if __name__ == "__main__":
    # Module config (mode='conv')
    num_activations = 4
    size = 21
    range_ = 4.0
    init = 'relu'

    # Deterministic parameter init, exactly as in LinearSpline.__init__
    grid_tensor = jnp.broadcast_to(
        jnp.linspace(-range_, range_, size), (num_activations, size)).astype(jnp.float32)
    coefficients_vect = initialize_coeffs(init, grid_tensor).reshape(-1)
    scaling_coeffs_vect = jnp.ones((1, num_activations, 1, 1), jnp.float32)

    # Example input: NCHW = (2, 4, 16, 16)
    key = jax.random.PRNGKey(0)
    x = 3.0 * jax.random.normal(key, (2, num_activations, 16, 16), jnp.float32)

    out = linear_spline_forward(
        x, coefficients_vect, scaling_coeffs_vect, size=size, range_=range_)
    out = jax.block_until_ready(out)

    ref = reference_forward(
        x, coefficients_vect, scaling_coeffs_vect, size=size, range_=range_)
    np.testing.assert_allclose(np.asarray(out), np.asarray(ref), rtol=1e-5, atol=1e-5)

    print("KERNEL_OK")
</pallas_src>

<mosaic_0001>
module attributes {stable_mosaic.version = 11 : i64} {
  func.func @_spline_kernel(%arg0: i32, %arg1: i32, %arg2: memref<4xf32, #tpu.memory_space<smem>>, %arg3: memref<4xf32, #tpu.memory_space<smem>>, %arg4: memref<4xf32, #tpu.memory_space<smem>>, %arg5: memref<76xf32, #tpu.memory_space<smem>>, %arg6: memref<2x1x2x128xf32, #tpu.memory_space<vmem>>, %arg7: memref<2x1x2x128xf32, #tpu.memory_space<vmem>>) attributes {dimension_semantics = [#tpu.dimension_semantics<parallel>, #tpu.dimension_semantics<parallel>], iteration_bounds = array<i64: 4, 1>, scalar_prefetch = 0 : i64, scratch_operands = 0 : i64, tpu.core_type = #tpu.core_type<tc>, window_params = [{transform_indices = @transform_0, window_bounds = array<i64: 4>}, {transform_indices = @transform_1, window_bounds = array<i64: 4>}, {transform_indices = @transform_2, window_bounds = array<i64: 4>}, {transform_indices = @transform_3, window_bounds = array<i64: 76>}, {transform_indices = @transform_4, window_bounds = array<i64: 2, 1, 2, 128>}, {transform_indices = @transform_5, window_bounds = array<i64: 2, 1, 2, 128>}]} {
    %0 = arith.index_cast %arg0 : i32 to index
    %1 = memref.load %arg2[%0] : memref<4xf32, #tpu.memory_space<smem>>
    %2 = arith.index_cast %arg0 : i32 to index
    %3 = memref.load %arg3[%2] : memref<4xf32, #tpu.memory_space<smem>>
    %4 = arith.index_cast %arg0 : i32 to index
    %5 = memref.load %arg4[%4] : memref<4xf32, #tpu.memory_space<smem>>
    %c0 = arith.constant 0 : index
    %c0_0 = arith.constant 0 : index
    %c0_1 = arith.constant 0 : index
    %c0_2 = arith.constant 0 : index
    %6 = vector.load %arg6[%c0, %c0_0, %c0_1, %c0_2] : memref<2x1x2x128xf32, #tpu.memory_space<vmem>>, vector<2x1x2x128xf32>
    %7 = vector.broadcast %1 : f32 to vector<2x1x2x128xf32>
    %8 = arith.mulf %6, %7 : vector<2x1x2x128xf32>
    %9 = vector.broadcast %5 : f32 to vector<2x1x2x128xf32>
    %10 = arith.mulf %9, %8 : vector<2x1x2x128xf32>
    %11 = vector.broadcast %3 : f32 to vector<2x1x2x128xf32>
    %12 = arith.addf %11, %10 : vector<2x1x2x128xf32>
    %c19_i32 = arith.constant 19 : i32
    %13 = arith.muli %arg0, %c19_i32 : i32
    %14 = arith.index_cast %13 : i32 to index
    %15 = memref.load %arg5[%14] : memref<76xf32, #tpu.memory_space<smem>>
    %cst = arith.constant -9.000000e+00 : f32
    %16 = vector.broadcast %cst : f32 to vector<2x1x2x128xf32>
    %17 = arith.maximumf %8, %16 : vector<2x1x2x128xf32>
    %18 = vector.broadcast %15 : f32 to vector<2x1x2x128xf32>
    %19 = arith.mulf %18, %17 : vector<2x1x2x128xf32>
    %c1_i32 = arith.constant 1 : i32
    %20 = arith.addi %13, %c1_i32 : i32
    %21 = arith.index_cast %20 : i32 to index
    %22 = memref.load %arg5[%21] : memref<76xf32, #tpu.memory_space<smem>>
    %cst_3 = arith.constant -8.000000e+00 : f32
    %23 = vector.broadcast %cst_3 : f32 to vector<2x1x2x128xf32>
    %24 = arith.maximumf %8, %23 : vector<2x1x2x128xf32>
    %25 = vector.broadcast %22 : f32 to vector<2x1x2x128xf32>
    %26 = arith.mulf %25, %24 : vector<2x1x2x128xf32>
    %27 = arith.addf %12, %26 : vector<2x1x2x128xf32>
    %c2_i32 = arith.constant 2 : i32
    %28 = arith.addi %13, %c2_i32 : i32
    %29 = arith.index_cast %28 : i32 to index
    %30 = memref.load %arg5[%29] : memref<76xf32, #tpu.memory_space<smem>>
    %cst_4 = arith.constant -7.000000e+00 : f32
    %31 = vector.broadcast %cst_4 : f32 to vector<2x1x2x128xf32>
    %32 = arith.maximumf %8, %31 : vector<2x1x2x128xf32>
    %33 = vector.broadcast %30 : f32 to vector<2x1x2x128xf32>
    %34 = arith.mulf %33, %32 : vector<2x1x2x128xf32>
    %35 = arith.addf %19, %34 : vector<2x1x2x128xf32>
    %c3_i32 = arith.constant 3 : i32
    %36 = arith.addi %13, %c3_i32 : i32
    %37 = arith.index_cast %36 : i32 to index
    %38 = memref.load %arg5[%37] : memref<76xf32, #tpu.memory_space<smem>>
    %cst_5 = arith.constant -6.000000e+00 : f32
    %39 = vector.broadcast %cst_5 : f32 to vector<2x1x2x128xf32>
    %40 = arith.maximumf %8, %39 : vector<2x1x2x128xf32>
    %41 = vector.broadcast %38 : f32 to vector<2x1x2x128xf32>
    %42 = arith.mulf %41, %40 : vector<2x1x2x128xf32>
    %43 = arith.addf %27, %42 : vector<2x1x2x128xf32>
    %c4_i32 = arith.constant 4 : i32
    %44 = arith.addi %13, %c4_i32 : i32
    %45 = arith.index_cast %44 : i32 to index
    %46 = memref.load %arg5[%45] : memref<76xf32, #tpu.memory_space<smem>>
    %cst_6 = arith.constant -5.000000e+00 : f32
    %47 = vector.broadcast %cst_6 : f32 to vector<2x1x2x128xf32>
    %48 = arith.maximumf %8, %47 : vector<2x1x2x128xf32>
    %49 = vector.broadcast %46 : f32 to vector<2x1x2x128xf32>
    %50 = arith.mulf %49, %48 : vector<2x1x2x128xf32>
    %51 = arith.addf %35, %50 : vector<2x1x2x128xf32>
    %c5_i32 = arith.constant 5 : i32
    %52 = arith.addi %13, %c5_i32 : i32
    %53 = arith.index_cast %52 : i32 to index
    %54 = memref.load %arg5[%53] : memref<76xf32, #tpu.memory_space<smem>>
    %cst_7 = arith.constant -4.000000e+00 : f32
    %55 = vector.broadcast %cst_7 : f32 to vector<2x1x2x128xf32>
    %56 = arith.maximumf %8, %55 : vector<2x1x2x128xf32>
    %57 = vector.broadcast %54 : f32 to vector<2x1x2x128xf32>
    %58 = arith.mulf %57, %56 : vector<2x1x2x128xf32>
    %59 = arith.addf %43, %58 : vector<2x1x2x128xf32>
    %c6_i32 = arith.constant 6 : i32
    %60 = arith.addi %13, %c6_i32 : i32
    %61 = arith.index_cast %60 : i32 to index
    %62 = memref.load %arg5[%61] : memref<76xf32, #tpu.memory_space<smem>>
    %cst_8 = arith.constant -3.000000e+00 : f32
    %63 = vector.broadcast %cst_8 : f32 to vector<2x1x2x128xf32>
    %64 = arith.maximumf %8, %63 : vector<2x1x2x128xf32>
    %65 = vector.broadcast %62 : f32 to vector<2x1x2x128xf32>
    %66 = arith.mulf %65, %64 : vector<2x1x2x128xf32>
    %67 = arith.addf %51, %66 : vector<2x1x2x128xf32>
    %c7_i32 = arith.constant 7 : i32
    %68 = arith.addi %13, %c7_i32 : i32
    %69 = arith.index_cast %68 : i32 to index
    %70 = memref.load %arg5[%69] : memref<76xf32, #tpu.memory_space<smem>>
    %cst_9 = arith.constant -2.000000e+00 : f32
    %71 = vector.broadcast %cst_9 : f32 to vector<2x1x2x128xf32>
    %72 = arith.maximumf %8, %71 : vector<2x1x2x128xf32>
    %73 = vector.broadcast %70 : f32 to vector<2x1x2x128xf32>
    %74 = arith.mulf %73, %72 : vector<2x1x2x128xf32>
    %75 = arith.addf %59, %74 : vector<2x1x2x128xf32>
    %c8_i32 = arith.constant 8 : i32
    %76 = arith.addi %13, %c8_i32 : i32
    %77 = arith.index_cast %76 : i32 to index
    %78 = memref.load %arg5[%77] : memref<76xf32, #tpu.memory_space<smem>>
    %cst_10 = arith.constant -1.000000e+00 : f32
    %79 = vector.broadcast %cst_10 : f32 to vector<2x1x2x128xf32>
    %80 = arith.maximumf %8, %79 : vector<2x1x2x128xf32>
    %81 = vector.broadcast %78 : f32 to vector<2x1x2x128xf32>
    %82 = arith.mulf %81, %80 : vector<2x1x2x128xf32>
    %83 = arith.addf %67, %82 : vector<2x1x2x128xf32>
    %c9_i32 = arith.constant 9 : i32
    %84 = arith.addi %13, %c9_i32 : i32
    %85 = arith.index_cast %84 : i32 to index
    %86 = memref.load %arg5[%85] : memref<76xf32, #tpu.memory_space<smem>>
    %cst_11 = arith.constant 0.000000e+00 : f32
    %87 = vector.broadcast %cst_11 : f32 to vector<2x1x2x128xf32>
    %88 = arith.maximumf %8, %87 : vector<2x1x2x128xf32>
    %89 = vector.broadcast %86 : f32 to vector<2x1x2x128xf32>
    %90 = arith.mulf %89, %88 : vector<2x1x2x128xf32>
    %91 = arith.addf %75, %90 : vector<2x1x2x128xf32>
    %c10_i32 = arith.constant 10 : i32
    %92 = arith.addi %13, %c10_i32 : i32
    %93 = arith.index_cast %92 : i32 to index
    %94 = memref.load %arg5[%93] : memref<76xf32, #tpu.memory_space<smem>>
    %cst_12 = arith.constant 1.000000e+00 : f32
    %95 = vector.broadcast %cst_12 : f32 to vector<2x1x2x128xf32>
    %96 = arith.maximumf %8, %95 : vector<2x1x2x128xf32>
    %97 = vector.broadcast %94 : f32 to vector<2x1x2x128xf32>
    %98 = arith.mulf %97, %96 : vector<2x1x2x128xf32>
    %99 = arith.addf %83, %98 : vector<2x1x2x128xf32>
    %c11_i32 = arith.constant 11 : i32
    %100 = arith.addi %13, %c11_i32 : i32
    %101 = arith.index_cast %100 : i32 to index
    %102 = memref.load %arg5[%101] : memref<76xf32, #tpu.memory_space<smem>>
    %cst_13 = arith.constant 2.000000e+00 : f32
    %103 = vector.broadcast %cst_13 : f32 to vector<2x1x2x128xf32>
    %104 = arith.maximumf %8, %103 : vector<2x1x2x128xf32>
    %105 = vector.broadcast %102 : f32 to vector<2x1x2x128xf32>
    %106 = arith.mulf %105, %104 : vector<2x1x2x128xf32>
    %107 = arith.addf %91, %106 : vector<2x1x2x128xf32>
    %c12_i32 = arith.constant 12 : i32
    %108 = arith.addi %13, %c12_i32 : i32
    %109 = arith.index_cast %108 : i32 to index
    %110 = memref.load %arg5[%109] : memref<76xf32, #tpu.memory_space<smem>>
    %cst_14 = arith.constant 3.000000e+00 : f32
    %111 = vector.broadcast %cst_14 : f32 to vector<2x1x2x128xf32>
    %112 = arith.maximumf %8, %111 : vector<2x1x2x128xf32>
    %113 = vector.broadcast %110 : f32 to vector<2x1x2x128xf32>
    %114 = arith.mulf %113, %112 : vector<2x1x2x128xf32>
    %115 = arith.addf %99, %114 : vector<2x1x2x128xf32>
    %c13_i32 = arith.constant 13 : i32
    %116 = arith.addi %13, %c13_i32 : i32
    %117 = arith.index_cast %116 : i32 to index
    %118 = memref.load %arg5[%117] : memref<76xf32, #tpu.memory_space<smem>>
    %cst_15 = arith.constant 4.000000e+00 : f32
    %119 = vector.broadcast %cst_15 : f32 to vector<2x1x2x128xf32>
    %120 = arith.maximumf %8, %119 : vector<2x1x2x128xf32>
    %121 = vector.broadcast %118 : f32 to vector<2x1x2x128xf32>
    %122 = arith.mulf %121, %120 : vector<2x1x2x128xf32>
    %123 = arith.addf %107, %122 : vector<2x1x2x128xf32>
    %c14_i32 = arith.constant 14 : i32
    %124 = arith.addi %13, %c14_i32 : i32
    %125 = arith.index_cast %124 : i32 to index
    %126 = memref.load %arg5[%125] : memref<76xf32, #tpu.memory_space<smem>>
    %cst_16 = arith.constant 5.000000e+00 : f32
    %127 = vector.broadcast %cst_16 : f32 to vector<2x1x2x128xf32>
    %128 = arith.maximumf %8, %127 : vector<2x1x2x128xf32>
    %129 = vector.broadcast %126 : f32 to vector<2x1x2x128xf32>
    %130 = arith.mulf %129, %128 : vector<2x1x2x128xf32>
    %131 = arith.addf %115, %130 : vector<2x1x2x128xf32>
    %c15_i32 = arith.constant 15 : i32
    %132 = arith.addi %13, %c15_i32 : i32
    %133 = arith.index_cast %132 : i32 to index
    %134 = memref.load %arg5[%133] : memref<76xf32, #tpu.memory_space<smem>>
    %cst_17 = arith.constant 6.000000e+00 : f32
    %135 = vector.broadcast %cst_17 : f32 to vector<2x1x2x128xf32>
    %136 = arith.maximumf %8, %135 : vector<2x1x2x128xf32>
    %137 = vector.broadcast %134 : f32 to vector<2x1x2x128xf32>
    %138 = arith.mulf %137, %136 : vector<2x1x2x128xf32>
    %139 = arith.addf %123, %138 : vector<2x1x2x128xf32>
    %c16_i32 = arith.constant 16 : i32
    %140 = arith.addi %13, %c16_i32 : i32
    %141 = arith.index_cast %140 : i32 to index
    %142 = memref.load %arg5[%141] : memref<76xf32, #tpu.memory_space<smem>>
    %cst_18 = arith.constant 7.000000e+00 : f32
    %143 = vector.broadcast %cst_18 : f32 to vector<2x1x2x128xf32>
    %144 = arith.maximumf %8, %143 : vector<2x1x2x128xf32>
    %145 = vector.broadcast %142 : f32 to vector<2x1x2x128xf32>
    %146 = arith.mulf %145, %144 : vector<2x1x2x128xf32>
    %147 = arith.addf %131, %146 : vector<2x1x2x128xf32>
    %c17_i32 = arith.constant 17 : i32
    %148 = arith.addi %13, %c17_i32 : i32
    %149 = arith.index_cast %148 : i32 to index
    %150 = memref.load %arg5[%149] : memref<76xf32, #tpu.memory_space<smem>>
    %cst_19 = arith.constant 8.000000e+00 : f32
    %151 = vector.broadcast %cst_19 : f32 to vector<2x1x2x128xf32>
    %152 = arith.maximumf %8, %151 : vector<2x1x2x128xf32>
    %153 = vector.broadcast %150 : f32 to vector<2x1x2x128xf32>
    %154 = arith.mulf %153, %152 : vector<2x1x2x128xf32>
    %155 = arith.addf %139, %154 : vector<2x1x2x128xf32>
    %c18_i32 = arith.constant 18 : i32
    %156 = arith.addi %13, %c18_i32 : i32
    %157 = arith.index_cast %156 : i32 to index
    %158 = memref.load %arg5[%157] : memref<76xf32, #tpu.memory_space<smem>>
    %cst_20 = arith.constant 9.000000e+00 : f32
    %159 = vector.broadcast %cst_20 : f32 to vector<2x1x2x128xf32>
    %160 = arith.maximumf %8, %159 : vector<2x1x2x128xf32>
    %161 = vector.broadcast %158 : f32 to vector<2x1x2x128xf32>
    %162 = arith.mulf %161, %160 : vector<2x1x2x128xf32>
    %163 = arith.addf %147, %162 : vector<2x1x2x128xf32>
    %164 = arith.addf %155, %163 : vector<2x1x2x128xf32>
    %c0_21 = arith.constant 0 : index
    %c0_22 = arith.constant 0 : index
    %c0_23 = arith.constant 0 : index
    %c0_24 = arith.constant 0 : index
    %165 = vector.load %arg7[%c0_21, %c0_22, %c0_23, %c0_24] : memref<2x1x2x128xf32, #tpu.memory_space<vmem>>, vector<2x1x2x128xf32>
    tpu.vector_store %arg7[%c0_21, %c0_22, %c0_23, %c0_24], %164 {strides = array<i32>} : memref<2x1x2x128xf32, #tpu.memory_space<vmem>>, vector<2x1x2x128xf32>,
    return
  }
  func.func @transform_0(%arg0: i32, %arg1: i32) -> i32 {
    %c0_i32 = arith.constant 0 : i32
    %c0_i32_0 = arith.constant 0 : i32
    return %c0_i32 : i32
  }
  func.func @transform_1(%arg0: i32, %arg1: i32) -> i32 {
    %c0_i32 = arith.constant 0 : i32
    %c0_i32_0 = arith.constant 0 : i32
    return %c0_i32 : i32
  }
  func.func @transform_2(%arg0: i32, %arg1: i32) -> i32 {
    %c0_i32 = arith.constant 0 : i32
    %c0_i32_0 = arith.constant 0 : i32
    return %c0_i32 : i32
  }
  func.func @transform_3(%arg0: i32, %arg1: i32) -> i32 {
    %c0_i32 = arith.constant 0 : i32
    %c0_i32_0 = arith.constant 0 : i32
    return %c0_i32 : i32
  }
  func.func @transform_4(%arg0: i32, %arg1: i32) -> (i32, i32, i32, i32) {
    %c0_i32 = arith.constant 0 : i32
    %c0_i32_0 = arith.constant 0 : i32
    %c0_i32_1 = arith.constant 0 : i32
    return %c0_i32, %arg0, %arg1, %c0_i32_0 : i32, i32, i32, i32
  }
  func.func @transform_5(%arg0: i32, %arg1: i32) -> (i32, i32, i32, i32) {
    %c0_i32 = arith.constant 0 : i32
    %c0_i32_0 = arith.constant 0 : i32
    %c0_i32_1 = arith.constant 0 : i32
    return %c0_i32, %arg0, %arg1, %c0_i32_0 : i32, i32, i32, i32
  }
}

</mosaic_0001>

<llo_original>
// kernel: tpu_custom_call.1
$region0: #{tpu_custom_call.1}
  #allocation0 [shape = 'u32[]', space=smem, size = 0x4, offset = 0x4, fixed_abs, tag = 'smem constant byte address 0x4 - core index']
  #allocation1 [shape = 'u32[144,128]{1,0:T(1,128)}', space=vmem, size = 0x12000, scoped, tag = 'internal scratch']
  %s0 = inlined_call_operand.hbm [shape: f32[4], index: 0, kind: input, shape index: {}]
  %s1 = inlined_call_operand.vmem [shape: f32[4], index: 1, kind: input, shape index: {}]
  %s2 = inlined_call_operand.vmem [shape: f32[4], index: 2, kind: input, shape index: {}]
  %s3 = inlined_call_operand.vmem [shape: f32[76], index: 3, kind: input, shape index: {}]
  %s4 = inlined_call_operand.hbm [shape: f32[2,4,2,128], index: 4, kind: input, shape index: {}]
  %s5 = inlined_call_operand.hbm [shape: f32[2,4,2,128], index: 5, kind: output, shape index: {}]
  %s6 = sld [smem:[#allocation0]]
  $region73: #{tpu_custom_call.1} parent=0
    _
  %s8 = ssub.s32 1, %s6
  %s9 = scalar_select 0, %s8, %s6
  $region1: #{tpu_custom_call.1} parent=0
    #allocation2 [shape = 'u8[512]{0}', space=smem, size = 0x200, scoped, tag = 'input window, operand 0, single buffered']
    #allocation3 [shape = 's32[2]{0}', space=sflag, size = 0x8, scoped, tag = 'scoped memory for tpu_custom_call.1']
    #allocation4 [shape = 's32[2]{0}', space=sflag, size = 0x8, scoped, tag = 'scoped memory for tpu_custom_call.1']
    #allocation5 [shape = 's32[2]{0}', space=sflag, size = 0x8, scoped, tag = 'scoped memory for tpu_custom_call.1']
    #allocation6 [shape = 's32[2]{0}', space=sflag, size = 0x8, scoped, tag = 'scoped memory for tpu_custom_call.1']
    #allocation7 [shape = 'u8[512]{0}', space=smem, size = 0x200, scoped, tag = 'input window, operand 1, single buffered']
    #allocation8 [shape = 'u8[512]{0}', space=smem, size = 0x200, scoped, tag = 'input window, operand 2, single buffered']
    #allocation9 [shape = 's32[1]{0}', space=sflag, size = 0x4, scoped, tag = 'scoped memory for tpu_custom_call.1']
    #allocation10 [shape = 'u8[512]{0}', space=smem, size = 0x200, scoped, tag = 'input window, operand 3, single buffered']
    #allocation11 [shape = 'u8[4096]{0}', space=vmem, size = 0x1000, scoped, tag = 'input window, operand 4']
    #allocation12 [shape = 'u8[4096]{0}', space=vmem, size = 0x1000, scoped, tag = 'output window, operand 0']
    %10 = vsyncpa [#allocation5], 0
    %11 = vsyncpa [#allocation6], 0
    %12 = vsyncpa [#allocation9], 0
    %13 = vsyncpa [#allocation3], 0
    %s14 = scalar_lea.sflag [#allocation3], 1
    %15 = vsyncpa %s14, 0
    %16 = vsyncpa [#allocation4], 0
    %s17 = scalar_lea.sflag [#allocation4], 1
    %18 = vsyncpa %s17, 0
    loop: start=0, step=1, limit=6
    $region2: #{tpu_custom_call.1} parent=1 // loop_pre_header
      _
    $region3: #{tpu_custom_call.1} parent=1 // loop_header
      %s20 = sphi 0, %s24
      %p21 = scmp.ge.s32.totalorder %s20, 6
      %s27 = sphi 0, %s39
      %s28 = sphi 0, %s35
      %s29 = sphi 0, %s27
      %s30 = sphi 0, %s28
      %s31 = sphi 0, %s29
      %s32 = sphi 0, %s30
      %s40 = sphi 0, %s40
      %s42 = sphi 0, %s40
      %s43 = sphi 0, %s42
      %s57 = sphi 0, %s43
      %s61 = sphi 0, %s61
      %s63 = sphi 0, %s61
      %s64 = sphi 0, %s63
      %s78 = sphi 0, %s64
      %s82 = sphi 0, %s82
      %s84 = sphi 0, %s82
      %s85 = sphi 0, %s84
      %s99 = sphi 0, %s85
      %s103 = sphi 0, %s103
      %s105 = sphi 0, %s103
      %s106 = sphi 0, %s105
      %s120 = sphi 0, %s106
      %s128 = sphi 0, %s130
      %s131 = sphi 0, %s128
      %s132 = sphi 0, %s131
      %s148 = sphi 0, %s132
      %s156 = sphi 0, %s158
      %s159 = sphi 0, %s156
      %s160 = sphi 0, %s159
      %s176 = sphi 0, %s160
    $region4: #{tpu_custom_call.1} parent=1 // loop_header_branch
      %23 = sbr.rel (%p21) target = $region8
    $region5: #{tpu_custom_call.1} parent=1 // loop_body
      %s25 = ssub.s32 %s20, 1
      %s26 = ssub.s32 %s20, 2
      %s33 = sadd.s32 1, %s28
      %p34 = scmp.ge.s32.totalorder %s33, 1
      %s35 = scalar_select %p34, 0, %s33
      %s36 = sadd.s32 1, %s27
      %s37 = scalar_select %p34, %s36, %s27
      %p38 = scmp.ge.s32.totalorder %s37, 4
      %s39 = scalar_select %p38, 0, %s37
      %s41 = sadd.s32 %s40, 1
      %p44 = scmp.eq.s32.totalorder %s20, 3
      %p45 = scmp.ne.s32.totalorder %s40, %s42
      %p46 = scmp.eq.s32.totalorder %s20, 0
      %p47 = por %p45, %p46
      %p48 = scmp.ne.s32.totalorder %s40, %s42
      %p49 = scmp.eq.s32.totalorder %s25, 3
      %p50 = por %p48, %p49
      %p51 = scmp.ne.s32.totalorder %s42, %s43
      %p52 = scmp.eq.s32.totalorder %s25, 0
      %p53 = por %p51, %p52
      %p54 = scmp.ne.s32.totalorder %s42, %s43
      %p55 = scmp.eq.s32.totalorder %s26, 3
      %p56 = por %p54, %p55
      %p58 = scmp.ne.s32.totalorder %s43, %s57
      %p59 = scmp.eq.s32.totalorder %s26, 0
      %p60 = por %p58, %p59
      %s62 = sadd.s32 %s61, 1
      %p65 = scmp.eq.s32.totalorder %s20, 3
      %p66 = scmp.ne.s32.totalorder %s61, %s63
      %p67 = scmp.eq.s32.totalorder %s20, 0
      %p68 = por %p66, %p67
      %p69 = scmp.ne.s32.totalorder %s61, %s63
      %p70 = scmp.eq.s32.totalorder %s25, 3
      %p71 = por %p69, %p70
      %p72 = scmp.ne.s32.totalorder %s63, %s64
      %p73 = scmp.eq.s32.totalorder %s25, 0
      %p74 = por %p72, %p73
      %p75 = scmp.ne.s32.totalorder %s63, %s64
      %p76 = scmp.eq.s32.totalorder %s26, 3
      %p77 = por %p75, %p76
      %p79 = scmp.ne.s32.totalorder %s64, %s78
      %p80 = scmp.eq.s32.totalorder %s26, 0
      %p81 = por %p79, %p80
      %s83 = sadd.s32 %s82, 1
      %p86 = scmp.eq.s32.totalorder %s20, 3
      %p87 = scmp.ne.s32.totalorder %s82, %s84
      %p88 = scmp.eq.s32.totalorder %s20, 0
      %p89 = por %p87, %p88
      %p90 = scmp.ne.s32.totalorder %s82, %s84
      %p91 = scmp.eq.s32.totalorder %s25, 3
      %p92 = por %p90, %p91
      %p93 = scmp.ne.s32.totalorder %s84, %s85
      %p94 = scmp.eq.s32.totalorder %s25, 0
      %p95 = por %p93, %p94
      %p96 = scmp.ne.s32.totalorder %s84, %s85
      %p97 = scmp.eq.s32.totalorder %s26, 3
      %p98 = por %p96, %p97
      %p100 = scmp.ne.s32.totalorder %s85, %s99
      %p101 = scmp.eq.s32.totalorder %s26, 0
      %p102 = por %p100, %p101
      %s104 = sadd.s32 %s103, 1
      %p107 = scmp.eq.s32.totalorder %s20, 3
      %p108 = scmp.ne.s32.totalorder %s103, %s105
      %p109 = scmp.eq.s32.totalorder %s20, 0
      %p110 = por %p108, %p109
      %p111 = scmp.ne.s32.totalorder %s103, %s105
      %p112 = scmp.eq.s32.totalorder %s25, 3
      %p113 = por %p111, %p112
      %p114 = scmp.ne.s32.totalorder %s105, %s106
      %p115 = scmp.eq.s32.totalorder %s25, 0
      %p116 = por %p114, %p115
      %p117 = scmp.ne.s32.totalorder %s105, %s106
      %p118 = scmp.eq.s32.totalorder %s26, 3
      %p119 = por %p117, %p118
      %p121 = scmp.ne.s32.totalorder %s106, %s120
      %p122 = scmp.eq.s32.totalorder %s26, 0
      %p123 = por %p121, %p122
      %s124 = ssub.s32 %s27, %s39
      %s125 = ssub.s32 %s28, %s35
      %s126 = sor.u32 %s124, %s125
      %p127 = scmp.eq.s32.totalorder %s126, 0
      %s129 = sadd.s32 %s128, 1
      %s130 = scalar_select %p127, %s128, %s129
      %p133 = pneg %p127
      %p134 = scmp.eq.s32.totalorder %s20, 3
      %p135 = por %p133, %p134
      %p136 = scmp.ne.s32.totalorder %s128, %s131
      %p137 = scmp.eq.s32.totalorder %s20, 0
      %p138 = por %p136, %p137
      %p139 = scmp.ne.s32.totalorder %s128, %s131
      %p140 = scmp.eq.s32.totalorder %s25, 3
      %p141 = por %p139, %p140
      %p142 = scmp.ne.s32.totalorder %s131, %s132
      %p143 = scmp.eq.s32.totalorder %s25, 0
      %p144 = por %p142, %p143
      %p145 = scmp.ne.s32.totalorder %s131, %s132
      %p146 = scmp.eq.s32.totalorder %s26, 3
      %p147 = por %p145, %p146
      %p149 = scmp.ne.s32.totalorder %s132, %s148
      %p150 = scmp.eq.s32.totalorder %s26, 0
      %p151 = por %p149, %p150
      %s152 = ssub.s32 %s27, %s39
      %s153 = ssub.s32 %s28, %s35
      %s154 = sor.u32 %s152, %s153
      %p155 = scmp.eq.s32.totalorder %s154, 0
      %s157 = sadd.s32 %s156, 1
      %s158 = scalar_select %p155, %s156, %s157
      %p161 = pneg %p155
      %p162 = scmp.eq.s32.totalorder %s20, 3
      %p163 = por %p161, %p162
      %p164 = scmp.ne.s32.totalorder %s156, %s159
      %p165 = scmp.eq.s32.totalorder %s20, 0
      %p166 = por %p164, %p165
      %p167 = scmp.ne.s32.totalorder %s156, %s159
      %p168 = scmp.eq.s32.totalorder %s25, 3
      %p169 = por %p167, %p168
      %p170 = scmp.ne.s32.totalorder %s159, %s160
      %p171 = scmp.eq.s32.totalorder %s25, 0
      %p172 = por %p170, %p171
      %p173 = scmp.ne.s32.totalorder %s159, %s160
      %p174 = scmp.eq.s32.totalorder %s26, 3
      %p175 = por %p173, %p174
      %p177 = scmp.ne.s32.totalorder %s160, %s176
      %p178 = scmp.eq.s32.totalorder %s26, 0
      %p179 = por %p177, %p178
      %p180 = scmp.le.s32.totalorder 1, %s20
      %p181 = scmp.lt.s32.totalorder %s20, 5
      %p182 = pnand %p180, %p181
      %p183 = pneg %p182
      // Predicated region
      $region9: #{tpu_custom_call.1} parent=5 // pred_check
        _
      $region10: #{tpu_custom_call.1} parent=5 // pred_check_branch
        %185 = sbr.rel (%p182) target = $region12
      $region11: #{tpu_custom_call.1} parent=5 // pred_region
        %s186 = ssub.s32 %s20, 1
        // Predicated region
        $region13: #{tpu_custom_call.1} parent=11 // pred_check
          %p187 = pneg %p53
        $region14: #{tpu_custom_call.1} parent=11 // pred_check_branch
          %189 = sbr.rel (%p187) target = $region16
        $region15: #{tpu_custom_call.1} parent=11 // pred_region
          %s191 = ssub.s32 16, 16
          %192 = vsyncadd [#allocation5], %s191
          %195 = dma.hbm_to_smem %s0, 16, [#allocation2], [#allocation5]
        $region16: #{tpu_custom_call.1} parent=11 // pred_fallthru
          _
        // Predicated region
        $region17: #{tpu_custom_call.1} parent=11 // pred_check
          %p196 = pneg %p74
        $region18: #{tpu_custom_call.1} parent=11 // pred_check_branch
          %198 = sbr.rel (%p196) target = $region20
        $region19: #{tpu_custom_call.1} parent=11 // pred_region
          %s200 = ssub.s32 16, 16
          %201 = vsyncadd [#allocation6], %s200
          %s203 = sshll.u32 %s1, 4
          %s204 = int_to_ptr.vmem [resolvable:$true] %s203
          %206 = dma.vmem_to_smem %s204, 16, [#allocation7], [#allocation6]
        $region20: #{tpu_custom_call.1} parent=11 // pred_fallthru
          _
        // Predicated region
        $region21: #{tpu_custom_call.1} parent=11 // pred_check
          %p207 = pneg %p95
        $region22: #{tpu_custom_call.1} parent=11 // pred_check_branch
          %209 = sbr.rel (%p207) target = $region24
        $region23: #{tpu_custom_call.1} parent=11 // pred_region
          %s211 = ssub.s32 16, 16
          %212 = vsyncadd [#allocation9], %s211
          %s214 = sshll.u32 %s2, 4
          %s215 = int_to_ptr.vmem [resolvable:$true] %s214
          %217 = dma.vmem_to_smem %s215, 16, [#allocation8], [#allocation9]
        $region24: #{tpu_custom_call.1} parent=11 // pred_fallthru
          _
        // Predicated region
        $region25: #{tpu_custom_call.1} parent=11 // pred_check
          %p218 = pneg %p116
        $region26: #{tpu_custom_call.1} parent=11 // pred_check_branch
          %220 = sbr.rel (%p218) target = $region28
        $region27: #{tpu_custom_call.1} parent=11 // pred_region
          %s222 = ssub.s32 16, 16
          %223 = vsyncadd [#allocation9], %s222
          %s225 = sshll.u32 %s3, 4
          %s226 = int_to_ptr.vmem [resolvable:$true] %s225
          %228 = dma.vmem_to_smem %s226, 16, [#allocation10], [#allocation9]
        $region28: #{tpu_custom_call.1} parent=11 // pred_fallthru
          _
      $region12: #{tpu_custom_call.1} parent=5 // pred_fallthru
        _
      %p229 = scmp.lt.s32.totalorder %s20, 4
      // Predicated region
      $region29: #{tpu_custom_call.1} parent=5 // pred_check
        %p230 = pneg %p229
      $region30: #{tpu_custom_call.1} parent=5 // pred_check_branch
        %232 = sbr.rel (%p230) target = $region32
      $region31: #{tpu_custom_call.1} parent=5 // pred_region
        // Predicated region
        $region33: #{tpu_custom_call.1} parent=31 // pred_check
          %p233 = pneg %p138
        $region34: #{tpu_custom_call.1} parent=31 // pred_check_branch
          %235 = sbr.rel (%p233) target = $region36
        $region35: #{tpu_custom_call.1} parent=31 // pred_region
          %s236 = sand.u32 %s128, 1
          %s237 = scalar_lea.sflag [#allocation3], %s236
          %s238 = sand.u32 %s128, 1
          %s239 = smul.addr %s238, 4
          %s240 = scalar_lea.vmem [#allocation11], %s239
          %s242 = ssub.s32 64, 64
          %243 = vsyncadd %s237, %s242
          %s244 = sadd.s32 %s28, %s27
          %s245 = smul.addr %s244, 32
          %s246 = scalar_lea.hbm %s4, %s245
          %s247 = sshll.u32 %s240, 4
          %s248 = int_to_ptr.vmem [resolvable:$true] %s247
          %253 = dma.hbm_to_vmem [thread:$0]  %s246, 64, %s248, %s237, 128, 32, 2
        $region36: #{tpu_custom_call.1} parent=31 // pred_fallthru
          _
      $region32: #{tpu_custom_call.1} parent=5 // pred_fallthru
        _
      %p254 = scmp.le.s32.totalorder 1, %s20
      %p255 = scmp.lt.s32.totalorder %s20, 5
      %p256 = pnand %p254, %p255
      %p257 = pneg %p256
      // Predicated region
      $region37: #{tpu_custom_call.1} parent=5 // pred_check
        _
      $region38: #{tpu_custom_call.1} parent=5 // pred_check_branch
        %259 = sbr.rel (%p256) target = $region40
      $region39: #{tpu_custom_call.1} parent=5 // pred_region
        %s260 = ssub.s32 %s20, 1
        // Predicated region
        $region41: #{tpu_custom_call.1} parent=39 // pred_check
          %p261 = pneg %p53
        $region42: #{tpu_custom_call.1} parent=39 // pred_check_branch
          %263 = sbr.rel (%p261) target = $region44
        $region43: #{tpu_custom_call.1} parent=39 // pred_region
          %264 = dma.done [#allocation5], 16
        $region44: #{tpu_custom_call.1} parent=39 // pred_fallthru
          _
        // Predicated region
        $region45: #{tpu_custom_call.1} parent=39 // pred_check
          %p265 = pneg %p74
        $region46: #{tpu_custom_call.1} parent=39 // pred_check_branch
          %267 = sbr.rel (%p265) target = $region48
        $region47: #{tpu_custom_call.1} parent=39 // pred_region
          %268 = dma.done [#allocation6], 16
        $region48: #{tpu_custom_call.1} parent=39 // pred_fallthru
          _
        // Predicated region
        $region49: #{tpu_custom_call.1} parent=39 // pred_check
          %p269 = pneg %p95
        $region50: #{tpu_custom_call.1} parent=39 // pred_check_branch
          %271 = sbr.rel (%p269) target = $region52
        $region51: #{tpu_custom_call.1} parent=39 // pred_region
          %272 = dma.done [#allocation9], 16
        $region52: #{tpu_custom_call.1} parent=39 // pred_fallthru
          _
        // Predicated region
        $region53: #{tpu_custom_call.1} parent=39 // pred_check
          %p273 = pneg %p116
        $region54: #{tpu_custom_call.1} parent=39 // pred_check_branch
          %275 = sbr.rel (%p273) target = $region56
        $region55: #{tpu_custom_call.1} parent=39 // pred_region
          %276 = dma.done [#allocation9], 16
        $region56: #{tpu_custom_call.1} parent=39 // pred_fallthru
          _
        %s277 = sand.u32 %s131, 1
        %s278 = scalar_lea.sflag [#allocation3], %s277
        %s279 = sand.u32 %s131, 1
        %s280 = smul.addr %s279, 4
        %s281 = scalar_lea.vmem [#allocation11], %s280
        // Predicated region
        $region57: #{tpu_custom_call.1} parent=39 // pred_check
          %p282 = pneg %p144
        $region58: #{tpu_custom_call.1} parent=39 // pred_check_branch
          %284 = sbr.rel (%p282) target = $region60
        $region59: #{tpu_custom_call.1} parent=39 // pred_region
          %285 = dma.done %s278, 64
        $region60: #{tpu_custom_call.1} parent=39 // pred_fallthru
          _
        %286 = sfence
        %p287 = pneg %p53
        %p288 = pneg %p50
        %p289 = pneg %p74
        %p290 = pneg %p71
        %p291 = pneg %p95
        %p292 = pneg %p92
        %p293 = pneg %p116
        %p294 = pneg %p113
        %s295 = sand.u32 %s131, 1
        %s296 = scalar_lea.sflag [#allocation3], %s295
        %s297 = sand.u32 %s131, 1
        %s298 = smul.addr %s297, 4
        %s299 = scalar_lea.vmem [#allocation11], %s298
        %p300 = pneg %p144
        %p301 = pneg %p141
        %p302 = pneg %p172
        %p303 = pneg %p169
        %s304 = sand.u32 %s159, 1
        %s305 = scalar_lea.sflag [#allocation4], %s304
        %s306 = sand.u32 %s159, 1
        %s307 = smul.addr %s306, 4
        %s308 = scalar_lea.vmem [#allocation12], %s307
        %s309 = sld [smem:[#allocation2 + %s29]]
        %s310 = sld [smem:[#allocation7 + %s29]]
        %s311 = sld [smem:[#allocation8 + %s29]]
        %v312 = vld [vmem:[%s281] sm:$0x3]
        %v313 = vld [vmem:[%s281 + $0x2] sm:$0x3]
        %v314 = vstv %s309
        %v315 = vmul.f32 %v312, %v314
        %v316 = vmul.f32 %v313, %v314
        %v317 = vstv %s311
        %v318 = vmul.f32 %v317, %v315
        %v319 = vmul.f32 %v317, %v316
        %v320 = vstv %s310
        %v321 = vadd.f32 %v320, %v318
        %v322 = vadd.f32 %v320, %v319
        %s323 = smul.u32 %s29, 19
        %s324 = sld [smem:[#allocation10 + %s323]]
        %v325 = vmax.f32 %v315, -9.0
        %v326 = vmax.f32 %v316, -9.0
        %v327 = vstv %s324
        %v328 = vmul.f32 %v327, %v325
        %v329 = vmul.f32 %v327, %v326
        %s330 = sadd.s32 %s323, 1
        %s331 = sld [smem:[#allocation10 + %s330]]
        %v332 = vmax.f32 %v315, -8.0
        %v333 = vmax.f32 %v316, -8.0
        %v334 = vstv %s331
        %v335 = vmul.f32 %v334, %v332
        %v336 = vmul.f32 %v334, %v333
        %v337 = vadd.f32 %v321, %v335
        %v338 = vadd.f32 %v322, %v336
        %s339 = sadd.s32 %s323, 2
        %s340 = sld [smem:[#allocation10 + %s339]]
        %v341 = vmax.f32 %v315, -7.0
        %v342 = vmax.f32 %v316, -7.0
        %v343 = vstv %s340
        %v344 = vmul.f32 %v343, %v341
        %v345 = vmul.f32 %v343, %v342
        %v346 = vadd.f32 %v328, %v344
        %v347 = vadd.f32 %v329, %v345
        %s348 = sadd.s32 %s323, 3
        %s349 = sld [smem:[#allocation10 + %s348]]
        %v350 = vmax.f32 %v315, -6.0
        %v351 = vmax.f32 %v316, -6.0
        %v352 = vstv %s349
        %v353 = vmul.f32 %v352, %v350
        %v354 = vmul.f32 %v352, %v351
        %v355 = vadd.f32 %v337, %v353
        %v356 = vadd.f32 %v338, %v354
        %s357 = sadd.s32 %s323, 4
        %s358 = sld [smem:[#allocation10 + %s357]]
        %v359 = vmax.f32 %v315, -5.0
        %v360 = vmax.f32 %v316, -5.0
        %v361 = vstv %s358
        %v362 = vmul.f32 %v361, %v359
        %v363 = vmul.f32 %v361, %v360
        %v364 = vadd.f32 %v346, %v362
        %v365 = vadd.f32 %v347, %v363
        %s366 = sadd.s32 %s323, 5
        %s367 = sld [smem:[#allocation10 + %s366]]
        %v368 = vmax.f32 %v315, -4.0
        %v369 = vmax.f32 %v316, -4.0
        %v370 = vstv %s367
        %v371 = vmul.f32 %v370, %v368
        %v372 = vmul.f32 %v370, %v369
        %v373 = vadd.f32 %v355, %v371
        %v374 = vadd.f32 %v356, %v372
        %s375 = sadd.s32 %s323, 6
        %s376 = sld [smem:[#allocation10 + %s375]]
        %v377 = vmax.f32 %v315, -3.0
        %v378 = vmax.f32 %v316, -3.0
        %v379 = vstv %s376
        %v380 = vmul.f32 %v379, %v377
        %v381 = vmul.f32 %v379, %v378
        %v382 = vadd.f32 %v364, %v380
        %v383 = vadd.f32 %v365, %v381
        %s384 = sadd.s32 %s323, 7
        %s385 = sld [smem:[#allocation10 + %s384]]
        %v386 = vmax.f32 %v315, -2.0
        %v387 = vmax.f32 %v316, -2.0
        %v388 = vstv %s385
        %v389 = vmul.f32 %v388, %v386
        %v390 = vmul.f32 %v388, %v387
        %v391 = vadd.f32 %v373, %v389
        %v392 = vadd.f32 %v374, %v390
        %s393 = sadd.s32 %s323, 8
        %s394 = sld [smem:[#allocation10 + %s393]]
        %v395 = vmax.f32 %v315, -1.0
        %v396 = vmax.f32 %v316, -1.0
        %v397 = vstv %s394
        %v398 = vmul.f32 %v397, %v395
        %v399 = vmul.f32 %v397, %v396
        %v400 = vadd.f32 %v382, %v398
        %v401 = vadd.f32 %v383, %v399
        %s402 = sadd.s32 %s323, 9
        %s403 = sld [smem:[#allocation10 + %s402]]
        %v404 = vmax.f32 %v315, 0.0
        %v405 = vmax.f32 %v316, 0.0
        %v406 = vstv %s403
        %v407 = vmul.f32 %v406, %v404
        %v408 = vmul.f32 %v406, %v405
        %v409 = vadd.f32 %v391, %v407
        %v410 = vadd.f32 %v392, %v408
        %s411 = sadd.s32 %s323, 10
        %s412 = sld [smem:[#allocation10 + %s411]]
        %v413 = vmax.f32 %v315, 1.0
        %v414 = vmax.f32 %v316, 1.0
        %v415 = vstv %s412
        %v416 = vmul.f32 %v415, %v413
        %v417 = vmul.f32 %v415, %v414
        %v418 = vadd.f32 %v400, %v416
        %v419 = vadd.f32 %v401, %v417
        %s420 = sadd.s32 %s323, 11
        %s421 = sld [smem:[#allocation10 + %s420]]
        %v422 = vmax.f32 %v315, 2.0
        %v423 = vmax.f32 %v316, 2.0
        %v424 = vstv %s421
        %v425 = vmul.f32 %v424, %v422
        %v426 = vmul.f32 %v424, %v423
        %v427 = vadd.f32 %v409, %v425
        %v428 = vadd.f32 %v410, %v426
        %s429 = sadd.s32 %s323, 12
        %s430 = sld [smem:[#allocation10 + %s429]]
        %v431 = vmax.f32 %v315, 3.0
        %v432 = vmax.f32 %v316, 3.0
        %v433 = vstv %s430
        %v434 = vmul.f32 %v433, %v431
        %v435 = vmul.f32 %v433, %v432
        %v436 = vadd.f32 %v418, %v434
        %v437 = vadd.f32 %v419, %v435
        %s438 = sadd.s32 %s323, 13
        %s439 = sld [smem:[#allocation10 + %s438]]
        %v440 = vmax.f32 %v315, 4.0
        %v441 = vmax.f32 %v316, 4.0
        %v442 = vstv %s439
        %v443 = vmul.f32 %v442, %v440
        %v444 = vmul.f32 %v442, %v441
        %v445 = vadd.f32 %v427, %v443
        %v446 = vadd.f32 %v428, %v444
        %s447 = sadd.s32 %s323, 14
        %s448 = sld [smem:[#allocation10 + %s447]]
        %v449 = vmax.f32 %v315, 5.0
        %v450 = vmax.f32 %v316, 5.0
        %v451 = vstv %s448
        %v452 = vmul.f32 %v451, %v449
        %v453 = vmul.f32 %v451, %v450
        %v454 = vadd.f32 %v436, %v452
        %v455 = vadd.f32 %v437, %v453
        %s456 = sadd.s32 %s323, 15
        %s457 = sld [smem:[#allocation10 + %s456]]
        %v458 = vmax.f32 %v315, 6.0
        %v459 = vmax.f32 %v316, 6.0
        %v460 = vstv %s457
        %v461 = vmul.f32 %v460, %v458
        %v462 = vmul.f32 %v460, %v459
        %v463 = vadd.f32 %v445, %v461
        %v464 = vadd.f32 %v446, %v462
        %s465 = sadd.s32 %s323, 16
        %s466 = sld [smem:[#allocation10 + %s465]]
        %v467 = vmax.f32 %v315, 7.0
        %v468 = vmax.f32 %v316, 7.0
        %v469 = vstv %s466
        %v470 = vmul.f32 %v469, %v467
        %v471 = vmul.f32 %v469, %v468
        %v472 = vadd.f32 %v454, %v470
        %v473 = vadd.f32 %v455, %v471
        %s474 = sadd.s32 %s323, 17
        %s475 = sld [smem:[#allocation10 + %s474]]
        %v476 = vmax.f32 %v315, 8.0
        %v477 = vmax.f32 %v316, 8.0
        %v478 = vstv %s475
        %v479 = vmul.f32 %v478, %v476
        %v480 = vmul.f32 %v478, %v477
        %v481 = vadd.f32 %v463, %v479
        %v482 = vadd.f32 %v464, %v480
        %s483 = sadd.s32 %s323, 18
        %s484 = sld [smem:[#allocation10 + %s483]]
        %v485 = vmax.f32 %v315, 9.0
        %v486 = vmax.f32 %v316, 9.0
        %v487 = vstv %s484
        %v488 = vmul.f32 %v487, %v485
        %v489 = vmul.f32 %v487, %v486
        %v490 = vadd.f32 %v472, %v488
        %v491 = vadd.f32 %v473, %v489
        %v492 = vadd.f32 %v481, %v490
        %v493 = vadd.f32 %v482, %v491
        %494 = vst [vmem:[%s308] sm:$0x3] %v492
        %495 = vst [vmem:[%s308 + $0x2] sm:$0x3] %v493
        %s496 = sand.u32 %s159, 1
        %s497 = scalar_lea.sflag [#allocation4], %s496
        %s498 = sand.u32 %s159, 1
        %s499 = smul.addr %s498, 4
        %s500 = scalar_lea.vmem [#allocation12], %s499
        // Predicated region
        $region61: #{tpu_custom_call.1} parent=39 // pred_check
          %p501 = pneg %p169
        $region62: #{tpu_custom_call.1} parent=39 // pred_check_branch
          %503 = sbr.rel (%p501) target = $region64
        $region63: #{tpu_custom_call.1} parent=39 // pred_region
          %s505 = ssub.s32 64, 64
          %506 = vsyncadd %s497, %s505
          %s507 = sadd.s32 %s30, %s29
          %s508 = smul.addr %s507, 32
          %s509 = scalar_lea.hbm %s5, %s508
          %s510 = sshll.u32 %s500, 4
          %s511 = int_to_ptr.vmem [resolvable:$true] %s510
          %516 = dma.vmem_to_hbm [thread:$0]  %s511, 64, %s509, %s497, 32, 128, 2
        $region64: #{tpu_custom_call.1} parent=39 // pred_fallthru
          _
      $region40: #{tpu_custom_call.1} parent=5 // pred_fallthru
        _
      %p517 = scmp.le.s32.totalorder 2, %s20
      // Predicated region
      $region65: #{tpu_custom_call.1} parent=5 // pred_check
        %p518 = pneg %p517
      $region66: #{tpu_custom_call.1} parent=5 // pred_check_branch
        %520 = sbr.rel (%p518) target = $region68
      $region67: #{tpu_custom_call.1} parent=5 // pred_region
        %s521 = ssub.s32 %s20, 2
        // Predicated region
        $region69: #{tpu_custom_call.1} parent=67 // pred_check
          %p522 = pneg %p175
        $region70: #{tpu_custom_call.1} parent=67 // pred_check_branch
          %524 = sbr.rel (%p522) target = $region72
        $region71: #{tpu_custom_call.1} parent=67 // pred_region
          %s525 = sand.u32 %s160, 1
          %s526 = scalar_lea.sflag [#allocation4], %s525
          %s527 = sand.u32 %s160, 1
          %s528 = smul.addr %s527, 4
          %s529 = scalar_lea.vmem [#allocation12], %s528
          %530 = dma.done %s526, 64
        $region72: #{tpu_custom_call.1} parent=67 // pred_fallthru
          _
      $region68: #{tpu_custom_call.1} parent=5 // pred_fallthru
        _
    $region6: #{tpu_custom_call.1} parent=1 // loop_footer
      %s24 = sadd.s32 1, %s20
    $region7: #{tpu_custom_call.1} parent=1 // loop_footer_branch
      %19 = sbr.rel target = $region3
    $region8: #{tpu_custom_call.1} parent=1 // loop_exit
      _
    %531 = vsyncpa [#allocation3], 1
    %s532 = scalar_lea.sflag [#allocation3], 1
    %533 = vsyncpa %s532, 1
    %534 = vsyncpa [#allocation4], 1
    %s535 = scalar_lea.sflag [#allocation4], 1
    %536 = vsyncpa %s535, 1
    %537 = vsyncpa [#allocation5], 1
    %s538 = scalar_lea.sflag [#allocation5], 1
    %539 = vsyncpa %s538, 1
    %540 = vsyncpa [#allocation6], 1
    %s541 = scalar_lea.sflag [#allocation6], 1
    %542 = vsyncpa %s541, 1
    %543 = vsyncpa [#allocation9], 1

</llo_original>
